<compile_context>
chip_gen: v6e
topology: v6e:2x2x1
jax: 0.10.0
libtpu: 0.0.40
codegen_flags: <defaults>
</compile_context>

<pallas_src>
import math

import jax
import jax.numpy as jnp
from jax.experimental import pallas as pl
from jax.experimental.pallas import tpu as pltpu


def _round_up(x, n):
    return -(-x // n) * n


# ---------------------------------------------------------------------------
# Fused kernel: all Eq1to1+ReLU layers + final (permute + Linear) in one body
# ---------------------------------------------------------------------------
def _make_fused_kernel(num_layers, compute_dtype):
    def kernel(*refs):
        # refs: x, pt, p, [wst_l, brow_l]*L, kron_w, kron_b, out
        x_ref, pt_ref, p_ref = refs[0], refs[1], refs[2]
        layer_refs = refs[3:3 + 2 * num_layers]
        kw_ref = refs[3 + 2 * num_layers]
        kb_ref = refs[4 + 2 * num_layers]
        o_ref = refs[5 + 2 * num_layers]

        pt = pt_ref[...]                    # (tn, rows)  f32, 0/1 entries
        p = p_ref[...]                      # (rows, tn)  f32, 0/1 entries
        x2 = x_ref[...]                     # (rows, D0)  compute dtype

        for l in range(num_layers):         # static unroll over layers
            w_ref = layer_refs[2 * l]       # (2, D_l, S_l): [w0, w1]
            b_ref = layer_refs[2 * l + 1]   # (rows, 1) per-row bias, f32
            w0 = w_ref[0]                   # identity-basis coefs (D, S)
            w1 = w_ref[1]                   # set-sum-basis coefs  (D, S)
            y_id = jnp.dot(x2, w0, preferred_element_type=jnp.float32)
            y_pl = jnp.dot(x2, w1, preferred_element_type=jnp.float32)
            # factored set pool: per-batch-element column sums, broadcast back.
            # P entries are 0/1 and accumulation is f32, so the pool is exact.
            sums = jnp.dot(pt, y_pl, preferred_element_type=jnp.float32)   # (tn, S)
            pool = jnp.dot(p, sums, preferred_element_type=jnp.float32)    # (rows, S)
            y = y_id + pool + b_ref[...]                                   # f32
            x2 = jnp.maximum(y, 0.0).astype(compute_dtype)                 # ReLU

        # epilogue: out[n,s,o] = sum_i x2[n*m+i, s] * W[o, i] + b[o]
        # via one matmul with kron(I_tn, W_pad): (tn*o_pad, rows) @ (rows, s_pad)
        res = jnp.dot(kw_ref[...], x2, preferred_element_type=jnp.float32)
        res = res + kb_ref[...]
        o_ref[...] = res.astype(o_ref.dtype)     # single dense store per step

    return kernel


# ---------------------------------------------------------------------------
# Tile sizing
# ---------------------------------------------------------------------------
def _pick_batch_tile(n_batch, m, widths):
    """Batch elements per grid step.

    rows = tn*m targets ~512-1024 (large tiles reach ~85% of HBM roofline, per-step
    overhead ~0.35us), bounded by a conservative per-step VMEM budget, while keeping
    >=2 grid steps when the batch allows so dimension_semantics=('parallel',) can
    shard v7x's two TensorCores.
    """
    max_w = max(widths)
    vmem_budget = 16 * 1024 * 1024                      # conservative across v5e/v6e/v7x
    bytes_per_row = (6 * max_w + 2 * widths[0]) * 4     # live f32 copies + 2x-buffered input
    rows_cap = max(m, vmem_budget // max(bytes_per_row, 1))
    tn = max(1, min(n_batch, min(1024, rows_cap) // m))
    if n_batch >= 2:
        tn = min(tn, (n_batch + 1) // 2)                # keep >=2 grid steps (megacore)
    sub = 8 // math.gcd(m, 8)                           # keep rows sublane-aligned
    return max(1, _round_up(tn, sub))


# ---------------------------------------------------------------------------
# Wrapper: parameter packing, BlockSpecs, grid over batch tiles
# ---------------------------------------------------------------------------
def net1to1_forward(x, eq_params, W_out, b_out, *, compute_dtype=jnp.bfloat16,
                    lane_pad=128, tn=None, vmem_limit_bytes=32 * 1024 * 1024):
    N, m, D0 = x.shape
    num_layers = len(eq_params)
    out_dtype = x.dtype

    # --- validate / collect per-layer dims ---
    dims = []
    din = D0
    for coefs, bias in eq_params:
        d, s, nb = coefs.shape
        assert nb == 2 and d == din
        assert s == m, "torch bias / final Linear broadcasting requires set_size == out_dim"
        dims.append((d, s))
        din = s
    S_last = din
    out_dim = W_out.shape[0]
    assert W_out.shape[1] == S_last == m

    s_pad_last = _round_up(S_last, lane_pad) if lane_pad else S_last   # lane-dense out
    o_pad = _round_up(out_dim, 8)                                      # sublane-dense out

    if tn is None:
        widths = [D0] + [s for _, s in dims[:-1]] + [s_pad_last]
        tn = _pick_batch_tile(N, m, widths)
    n_pad = _round_up(N, tn)
    rows = tn * m
    grid = (n_pad // tn,)

    # --- pack operands ---
    x_p = x if n_pad == N else jnp.pad(x, ((0, n_pad - N), (0, 0), (0, 0)))
    x2d = x_p.reshape(n_pad * m, D0).astype(compute_dtype)     # batch-packed rows

    p_mat = jnp.kron(jnp.eye(tn, dtype=jnp.float32),
                     jnp.ones((m, 1), jnp.float32))            # (rows, tn)
    pt_mat = p_mat.T                                           # (tn, rows)

    layer_args, layer_specs = [], []
    flops_per_step = 0
    for l, (coefs, bias) in enumerate(eq_params):
        d, s = dims[l]
        s_blk = s_pad_last if l == num_layers - 1 else s
        wst = jnp.stack([coefs[:, :, 0], coefs[:, :, 1]], axis=0)      # (2, d, s)
        if s_blk != s:
            wst = jnp.pad(wst, ((0, 0), (0, 0), (0, s_blk - s)))       # zero-pad lanes
        wst = wst.astype(compute_dtype)
        brow = jnp.tile(bias[0].astype(jnp.float32), (tn, 1))          # (rows, 1)
        layer_args += [wst, brow]
        layer_specs += [
            pl.BlockSpec((2, d, s_blk), lambda i: (0, 0, 0)),
            pl.BlockSpec((rows, 1), lambda i: (0, 0)),
        ]
        flops_per_step += 2 * rows * d * s_blk * 2      # identity + pooled-basis matmuls
        flops_per_step += 2 * tn * rows * s_blk * 2     # the two skinny pool matmuls

    W_pad = jnp.zeros((o_pad, m), W_out.dtype).at[:out_dim].set(W_out)
    b_pad = jnp.zeros((o_pad,), b_out.dtype).at[:out_dim].set(b_out)
    kron_w = jnp.kron(jnp.eye(tn, dtype=jnp.float32), W_pad).astype(compute_dtype)
    kron_b = jnp.tile(b_pad.reshape(o_pad, 1), (tn, 1)).astype(jnp.float32)
    flops_per_step += 2 * (tn * o_pad) * rows * s_pad_last

    in_args = [x2d, pt_mat, p_mat, *layer_args, kron_w, kron_b]
    in_specs = [
        pl.BlockSpec((rows, D0), lambda i: (i, 0)),          # batch-packed activations
        pl.BlockSpec((tn, rows), lambda i: (0, 0)),          # P.T (resident)
        pl.BlockSpec((rows, tn), lambda i: (0, 0)),          # P   (resident)
        *layer_specs,                                        # per-layer weights/bias
        pl.BlockSpec((tn * o_pad, rows), lambda i: (0, 0)),  # kron(I, W_out) (resident)
        pl.BlockSpec((tn * o_pad, 1), lambda i: (0, 0)),     # output bias rows
    ]
    out_specs = pl.BlockSpec((tn * o_pad, s_pad_last), lambda i: (i, 0))
    out_shape = jax.ShapeDtypeStruct((n_pad * o_pad, s_pad_last), jnp.float32)

    bytes_accessed = sum(int(a.size) * a.dtype.itemsize for a in in_args)
    bytes_accessed += n_pad * o_pad * s_pad_last * 4
    cost = pl.CostEstimate(flops=int(flops_per_step * grid[0]),
                           transcendentals=0,
                           bytes_accessed=int(bytes_accessed))

    out = pl.pallas_call(
        _make_fused_kernel(num_layers, compute_dtype),
        out_shape=out_shape,
        grid=grid,
        in_specs=in_specs,
        out_specs=out_specs,
        compiler_params=pltpu.CompilerParams(
            dimension_semantics=("parallel",),
            vmem_limit_bytes=vmem_limit_bytes),
        cost_estimate=cost,
    )(*in_args)

    # restore (N, S_last, out_dim) layout; strip batch / lane / sublane padding
    out = out.reshape(n_pad, o_pad, s_pad_last)[:N, :out_dim, :S_last]
    return jnp.transpose(out, (0, 2, 1)).astype(out_dtype)


# ---------------------------------------------------------------------------
# Pure-JAX references
# ---------------------------------------------------------------------------
def ops_1_to_1_ref(x):
    op1 = x
    op2 = jnp.broadcast_to(jnp.sum(x, axis=1, keepdims=True), x.shape)
    return jnp.stack([op1, op2], axis=2)            # (N, m, 2, D)


def net1to1_ref(x, eq_params, W_out, b_out):
    """Exact f32 mirror of the PyTorch forward."""
    for coefs, bias in eq_params:
        ops = ops_1_to_1_ref(x)
        out = jnp.einsum('dsb,nibd->nis', coefs, ops)
        out = out + bias                             # (N,m,S) + (1,S,1)
        x = jax.nn.relu(out)
    x = jnp.transpose(x, (0, 2, 1))
    return jnp.einsum('nsf,of->nso', x, W_out) + b_out


def net1to1_lowp_ref(x, eq_params, W_out, b_out, compute_dtype):
    """Mirror of the kernel's cast points (matmul inputs in compute_dtype, f32
    accumulation, bias/ReLU in f32) for validating the low-precision path."""
    h = x.astype(compute_dtype)
    for coefs, bias in eq_params:
        w0 = coefs[:, :, 0].astype(compute_dtype)
        w1 = coefs[:, :, 1].astype(compute_dtype)
        y_id = jnp.einsum('nid,ds->nis', h, w0, preferred_element_type=jnp.float32)
        y_pl = jnp.einsum('nid,ds->nis', h, w1, preferred_element_type=jnp.float32)
        pool = jnp.broadcast_to(jnp.sum(y_pl, axis=1, keepdims=True), y_pl.shape)
        y = y_id + pool + bias
        h = jnp.maximum(y, 0.0).astype(compute_dtype)
    W_c = W_out.astype(compute_dtype)
    out = jnp.einsum('nis,oi->nso', h, W_c, preferred_element_type=jnp.float32)
    return out + b_out


# ---------------------------------------------------------------------------
if __name__ == "__main__":
    key = jax.random.PRNGKey(0)

    N, m = 4, 8                       # batch, set size
    layers = [(4, 8), (8, 8)]         # (in_dim, out_dim) per Eq1to1; out_dim == m
    final_out_dim = 6

    # --- deterministic parameters (shapes match the module's __init__) ---
    eq_params = []
    for din, dout in layers:
        key, kc, kb0 = jax.random.split(key, 3)
        std = math.sqrt(2.0 / (din + dout + 2))
        coefs = std * jax.random.normal(kc, (din, dout, 2), jnp.float32)
        # nn.Parameter init is zeros; small nonzero values here exercise the
        # bias-broadcast / row-tiling path in the check.
        bias = 0.1 * jax.random.normal(kb0, (1, dout, 1), jnp.float32)
        eq_params.append((coefs, bias))

    in_feat = layers[-1][-1]
    key, kw_, kb_ = jax.random.split(key, 3)
    bound = 1.0 / math.sqrt(in_feat)
    W_out = jax.random.uniform(kw_, (final_out_dim, in_feat), jnp.float32, -bound, bound)
    b_out = jax.random.uniform(kb_, (final_out_dim,), jnp.float32, -bound, bound)

    key, kx = jax.random.split(key)
    x = jax.random.normal(kx, (N, m, layers[0][0]), jnp.float32)

    # f32 path: validates semantics against the PyTorch-exact reference.
    y_f32 = jax.block_until_ready(
        net1to1_forward(x, eq_params, W_out, b_out, compute_dtype=jnp.float32))
    y_ref = net1to1_ref(x, eq_params, W_out, b_out)
    assert y_f32.shape == (N, in_feat, final_out_dim)
    assert jnp.allclose(y_f32, y_ref, atol=1e-4, rtol=1e-4), "f32 kernel mismatch vs reference"

    # bf16 path (default / production): validates against a cast-matched reference.
    y_bf16 = jax.block_until_ready(net1to1_forward(x, eq_params, W_out, b_out))
    y_lowp = net1to1_lowp_ref(x, eq_params, W_out, b_out, jnp.bfloat16)
    assert y_bf16.shape == (N, in_feat, final_out_dim)
    assert jnp.allclose(y_bf16, y_lowp, atol=1e-2, rtol=1e-2), "bf16 kernel mismatch vs bf16 reference"

    print("KERNEL_OK")
</pallas_src>

<mosaic_0001>
module attributes {stable_mosaic.version = 11 : i64} {
  func.func @kernel(%arg0: i32, %arg1: memref<16x4xf32, #tpu.memory_space<vmem>>, %arg2: memref<2x16xf32, #tpu.memory_space<vmem>>, %arg3: memref<16x2xf32, #tpu.memory_space<vmem>>, %arg4: memref<2x4x8xf32, #tpu.memory_space<vmem>>, %arg5: memref<16x1xf32, #tpu.memory_space<vmem>>, %arg6: memref<2x8x128xf32, #tpu.memory_space<vmem>>, %arg7: memref<16x1xf32, #tpu.memory_space<vmem>>, %arg8: memref<16x16xf32, #tpu.memory_space<vmem>>, %arg9: memref<16x1xf32, #tpu.memory_space<vmem>>, %arg10: memref<16x128xf32, #tpu.memory_space<vmem>>) attributes {dimension_semantics = [#tpu.dimension_semantics<parallel>], iteration_bounds = array<i64: 2>, scalar_prefetch = 0 : i64, scratch_operands = 0 : i64, tpu.core_type = #tpu.core_type<tc>, window_params = [{transform_indices = @transform_0, window_bounds = array<i64: 16, 4>}, {pipeline_mode = #tpu.pipeline_mode<synchronous>, transform_indices = @transform_1, window_bounds = array<i64: 2, 16>}, {pipeline_mode = #tpu.pipeline_mode<synchronous>, transform_indices = @transform_2, window_bounds = array<i64: 16, 2>}, {pipeline_mode = #tpu.pipeline_mode<synchronous>, transform_indices = @transform_3, window_bounds = array<i64: 2, 4, 8>}, {pipeline_mode = #tpu.pipeline_mode<synchronous>, transform_indices = @transform_4, window_bounds = array<i64: 16, 1>}, {pipeline_mode = #tpu.pipeline_mode<synchronous>, transform_indices = @transform_5, window_bounds = array<i64: 2, 8, 128>}, {pipeline_mode = #tpu.pipeline_mode<synchronous>, transform_indices = @transform_6, window_bounds = array<i64: 16, 1>}, {pipeline_mode = #tpu.pipeline_mode<synchronous>, transform_indices = @transform_7, window_bounds = array<i64: 16, 16>}, {pipeline_mode = #tpu.pipeline_mode<synchronous>, transform_indices = @transform_8, window_bounds = array<i64: 16, 1>}, {transform_indices = @transform_9, window_bounds = array<i64: 16, 128>}]} {
    %c0 = arith.constant 0 : index
    %c0_0 = arith.constant 0 : index
    %0 = vector.load %arg2[%c0, %c0_0] : memref<2x16xf32, #tpu.memory_space<vmem>>, vector<2x16xf32>
    %c0_1 = arith.constant 0 : index
    %c0_2 = arith.constant 0 : index
    %1 = vector.load %arg3[%c0_1, %c0_2] : memref<16x2xf32, #tpu.memory_space<vmem>>, vector<16x2xf32>
    %c0_3 = arith.constant 0 : index
    %c0_4 = arith.constant 0 : index
    %2 = vector.load %arg1[%c0_3, %c0_4] : memref<16x4xf32, #tpu.memory_space<vmem>>, vector<16x4xf32>
    %c0_5 = arith.constant 0 : index
    %c0_6 = arith.constant 0 : index
    %c0_7 = arith.constant 0 : index
    %3 = vector.load %arg4[%c0_5, %c0_6, %c0_7] : memref<2x4x8xf32, #tpu.memory_space<vmem>>, vector<1x4x8xf32>
    %4 = vector.shape_cast %3 : vector<1x4x8xf32> to vector<4x8xf32>
    %c1 = arith.constant 1 : index
    %c0_8 = arith.constant 0 : index
    %c0_9 = arith.constant 0 : index
    %5 = vector.load %arg4[%c1, %c0_8, %c0_9] : memref<2x4x8xf32, #tpu.memory_space<vmem>>, vector<1x4x8xf32>
    %6 = vector.shape_cast %5 : vector<1x4x8xf32> to vector<4x8xf32>
    %cst = arith.constant dense<0.000000e+00> : vector<16x8xf32>
    %7 = tpu.matmul %2, %4, %cst {dimension_numbers = #tpu.dot_dimension_numbers<[1], [0], [0], [1], [0, 0, 1, 1], [], []>} : vector<16x4xf32>, vector<4x8xf32>, vector<16x8xf32> -> vector<16x8xf32>
    %cst_10 = arith.constant dense<0.000000e+00> : vector<16x8xf32>
    %8 = tpu.matmul %2, %6, %cst_10 {dimension_numbers = #tpu.dot_dimension_numbers<[1], [0], [0], [1], [0, 0, 1, 1], [], []>} : vector<16x4xf32>, vector<4x8xf32>, vector<16x8xf32> -> vector<16x8xf32>
    %cst_11 = arith.constant dense<0.000000e+00> : vector<2x8xf32>
    %9 = tpu.matmul %0, %8, %cst_11 {dimension_numbers = #tpu.dot_dimension_numbers<[1], [0], [0], [1], [0, 0, 1, 1], [], []>} : vector<2x16xf32>, vector<16x8xf32>, vector<2x8xf32> -> vector<2x8xf32>
    %cst_12 = arith.constant dense<0.000000e+00> : vector<16x8xf32>
    %10 = tpu.matmul %1, %9, %cst_12 {dimension_numbers = #tpu.dot_dimension_numbers<[1], [0], [0], [1], [0, 0, 1, 1], [], []>} : vector<16x2xf32>, vector<2x8xf32>, vector<16x8xf32> -> vector<16x8xf32>
    %11 = arith.addf %7, %10 : vector<16x8xf32>
    %c0_13 = arith.constant 0 : index
    %c0_14 = arith.constant 0 : index
    %12 = vector.load %arg5[%c0_13, %c0_14] : memref<16x1xf32, #tpu.memory_space<vmem>>, vector<16x1xf32>
    %13 = vector.broadcast %12 : vector<16x1xf32> to vector<16x8xf32>
    %14 = arith.addf %11, %13 : vector<16x8xf32>
    %cst_15 = arith.constant 0.000000e+00 : f32
    %15 = vector.broadcast %cst_15 : f32 to vector<16x8xf32>
    %16 = arith.maximumf %14, %15 : vector<16x8xf32>
    %c0_16 = arith.constant 0 : index
    %c0_17 = arith.constant 0 : index
    %c0_18 = arith.constant 0 : index
    %17 = vector.load %arg6[%c0_16, %c0_17, %c0_18] : memref<2x8x128xf32, #tpu.memory_space<vmem>>, vector<1x8x128xf32>
    %18 = vector.shape_cast %17 : vector<1x8x128xf32> to vector<8x128xf32>
    %c1_19 = arith.constant 1 : index
    %c0_20 = arith.constant 0 : index
    %c0_21 = arith.constant 0 : index
    %19 = vector.load %arg6[%c1_19, %c0_20, %c0_21] : memref<2x8x128xf32, #tpu.memory_space<vmem>>, vector<1x8x128xf32>
    %20 = vector.shape_cast %19 : vector<1x8x128xf32> to vector<8x128xf32>
    %cst_22 = arith.constant dense<0.000000e+00> : vector<16x128xf32>
    %21 = tpu.matmul %16, %18, %cst_22 {dimension_numbers = #tpu.dot_dimension_numbers<[1], [0], [0], [1], [0, 0, 1, 1], [], []>} : vector<16x8xf32>, vector<8x128xf32>, vector<16x128xf32> -> vector<16x128xf32>
    %cst_23 = arith.constant dense<0.000000e+00> : vector<16x128xf32>
    %22 = tpu.matmul %16, %20, %cst_23 {dimension_numbers = #tpu.dot_dimension_numbers<[1], [0], [0], [1], [0, 0, 1, 1], [], []>} : vector<16x8xf32>, vector<8x128xf32>, vector<16x128xf32> -> vector<16x128xf32>
    %cst_24 = arith.constant dense<0.000000e+00> : vector<2x128xf32>
    %23 = tpu.matmul %0, %22, %cst_24 {dimension_numbers = #tpu.dot_dimension_numbers<[1], [0], [0], [1], [0, 0, 1, 1], [], []>} : vector<2x16xf32>, vector<16x128xf32>, vector<2x128xf32> -> vector<2x128xf32>
    %cst_25 = arith.constant dense<0.000000e+00> : vector<16x128xf32>
    %24 = tpu.matmul %1, %23, %cst_25 {dimension_numbers = #tpu.dot_dimension_numbers<[1], [0], [0], [1], [0, 0, 1, 1], [], []>} : vector<16x2xf32>, vector<2x128xf32>, vector<16x128xf32> -> vector<16x128xf32>
    %25 = arith.addf %21, %24 : vector<16x128xf32>
    %c0_26 = arith.constant 0 : index
    %c0_27 = arith.constant 0 : index
    %26 = vector.load %arg7[%c0_26, %c0_27] : memref<16x1xf32, #tpu.memory_space<vmem>>, vector<16x1xf32>
    %27 = vector.broadcast %26 : vector<16x1xf32> to vector<16x128xf32>
    %28 = arith.addf %25, %27 : vector<16x128xf32>
    %cst_28 = arith.constant 0.000000e+00 : f32
    %29 = vector.broadcast %cst_28 : f32 to vector<16x128xf32>
    %30 = arith.maximumf %28, %29 : vector<16x128xf32>
    %c0_29 = arith.constant 0 : index
    %c0_30 = arith.constant 0 : index
    %31 = vector.load %arg8[%c0_29, %c0_30] : memref<16x16xf32, #tpu.memory_space<vmem>>, vector<16x16xf32>
    %cst_31 = arith.constant dense<0.000000e+00> : vector<16x128xf32>
    %32 = tpu.matmul %31, %30, %cst_31 {dimension_numbers = #tpu.dot_dimension_numbers<[1], [0], [0], [1], [0, 0, 1, 1], [], []>} : vector<16x16xf32>, vector<16x128xf32>, vector<16x128xf32> -> vector<16x128xf32>
    %c0_32 = arith.constant 0 : index
    %c0_33 = arith.constant 0 : index
    %33 = vector.load %arg9[%c0_32, %c0_33] : memref<16x1xf32, #tpu.memory_space<vmem>>, vector<16x1xf32>
    %34 = vector.broadcast %33 : vector<16x1xf32> to vector<16x128xf32>
    %35 = arith.addf %32, %34 : vector<16x128xf32>
    %c0_34 = arith.constant 0 : index
    %c0_35 = arith.constant 0 : index
    %36 = vector.load %arg10[%c0_34, %c0_35] : memref<16x128xf32, #tpu.memory_space<vmem>>, vector<16x128xf32>
    tpu.vector_store %arg10[%c0_34, %c0_35], %35 {strides = array<i32>} : memref<16x128xf32, #tpu.memory_space<vmem>>, vector<16x128xf32>,
    return
  }
  func.func @transform_0(%arg0: i32) -> (i32, i32) {
    %c0_i32 = arith.constant 0 : i32
    %c0_i32_0 = arith.constant 0 : i32
    return %arg0, %c0_i32 : i32, i32
  }
  func.func @transform_1(%arg0: i32) -> (i32, i32) {
    %c0_i32 = arith.constant 0 : i32
    %c0_i32_0 = arith.constant 0 : i32
    %c0_i32_1 = arith.constant 0 : i32
    return %c0_i32, %c0_i32_0 : i32, i32
  }
  func.func @transform_2(%arg0: i32) -> (i32, i32) {
    %c0_i32 = arith.constant 0 : i32
    %c0_i32_0 = arith.constant 0 : i32
    %c0_i32_1 = arith.constant 0 : i32
    return %c0_i32, %c0_i32_0 : i32, i32
  }
  func.func @transform_3(%arg0: i32) -> (i32, i32, i32) {
    %c0_i32 = arith.constant 0 : i32
    %c0_i32_0 = arith.constant 0 : i32
    %c0_i32_1 = arith.constant 0 : i32
    %c0_i32_2 = arith.constant 0 : i32
    return %c0_i32, %c0_i32_0, %c0_i32_1 : i32, i32, i32
  }
  func.func @transform_4(%arg0: i32) -> (i32, i32) {
    %c0_i32 = arith.constant 0 : i32
    %c0_i32_0 = arith.constant 0 : i32
    %c0_i32_1 = arith.constant 0 : i32
    return %c0_i32, %c0_i32_0 : i32, i32
  }
  func.func @transform_5(%arg0: i32) -> (i32, i32, i32) {
    %c0_i32 = arith.constant 0 : i32
    %c0_i32_0 = arith.constant 0 : i32
    %c0_i32_1 = arith.constant 0 : i32
    %c0_i32_2 = arith.constant 0 : i32
    return %c0_i32, %c0_i32_0, %c0_i32_1 : i32, i32, i32
  }
  func.func @transform_6(%arg0: i32) -> (i32, i32) {
    %c0_i32 = arith.constant 0 : i32
    %c0_i32_0 = arith.constant 0 : i32
    %c0_i32_1 = arith.constant 0 : i32
    return %c0_i32, %c0_i32_0 : i32, i32
  }
  func.func @transform_7(%arg0: i32) -> (i32, i32) {
    %c0_i32 = arith.constant 0 : i32
    %c0_i32_0 = arith.constant 0 : i32
    %c0_i32_1 = arith.constant 0 : i32
    return %c0_i32, %c0_i32_0 : i32, i32
  }
  func.func @transform_8(%arg0: i32) -> (i32, i32) {
    %c0_i32 = arith.constant 0 : i32
    %c0_i32_0 = arith.constant 0 : i32
    %c0_i32_1 = arith.constant 0 : i32
    return %c0_i32, %c0_i32_0 : i32, i32
  }
  func.func @transform_9(%arg0: i32) -> (i32, i32) {
    %c0_i32 = arith.constant 0 : i32
    %c0_i32_0 = arith.constant 0 : i32
    return %arg0, %c0_i32 : i32, i32
  }
}

</mosaic_0001>

<llo_original>
// kernel: tpu_custom_call.1
$region0: #{tpu_custom_call.1}
  #allocation0 [shape = 'u32[]', space=smem, size = 0x4, offset = 0x4, fixed_abs, tag = 'smem constant byte address 0x4 - core index']
  #allocation1 [shape = 'u32[144,128]{1,0:T(1,128)}', space=vmem, size = 0x12000, scoped, tag = 'internal scratch']
  %s0 = inlined_call_operand.vmem [shape: f32[32,4], index: 0, kind: input, shape index: {}]
  %s1 = inlined_call_operand.vmem [shape: f32[2,16], index: 1, kind: input, shape index: {}]
  %s2 = inlined_call_operand.vmem [shape: f32[16,2], index: 2, kind: input, shape index: {}]
  %s3 = inlined_call_operand.vmem [shape: f32[2,4,8], index: 3, kind: input, shape index: {}]
  %s4 = inlined_call_operand.vmem [shape: f32[16,1], index: 4, kind: input, shape index: {}]
  %s5 = inlined_call_operand.vmem [shape: f32[2,8,128], index: 5, kind: input, shape index: {}]
  %s6 = inlined_call_operand.vmem [shape: f32[16,1], index: 6, kind: input, shape index: {}]
  %s7 = inlined_call_operand.vmem [shape: f32[16,16], index: 7, kind: input, shape index: {}]
  %s8 = inlined_call_operand.vmem [shape: f32[16,1], index: 8, kind: input, shape index: {}]
  %s9 = inlined_call_operand.hbm [shape: f32[32,128], index: 9, kind: output, shape index: {}]
  %s10 = sld [smem:[#allocation0]]
  $region69: #{tpu_custom_call.1} parent=0
    _
  %s12 = ssub.s32 1, %s10
  %s13 = scalar_select 0, %s12, %s10
  $region1: #{tpu_custom_call.1} parent=0
    #allocation2 [shape = 'u8[16384]{0}', space=vmem, size = 0x4000, scoped, tag = 'output window, operand 0']
    #allocation3 [shape = 's32[2]{0}', space=sflag, size = 0x8, scoped, tag = 'scoped memory for tpu_custom_call.1']
    %14 = vsyncpa [#allocation3], 0
    %s15 = scalar_lea.sflag [#allocation3], 1
    %16 = vsyncpa %s15, 0
    loop: start=0, step=1, limit=4
    $region2: #{tpu_custom_call.1} parent=1 // loop_pre_header
      _
    $region3: #{tpu_custom_call.1} parent=1 // loop_header
      %s18 = sphi 0, %s22
      %p19 = scmp.ge.s32.totalorder %s18, 4
      %s28 = sphi 0, %s30
      %s31 = sphi 0, %s28
      %s32 = sphi 0, %s31
      %s48 = sphi 0, %s32
      %s52 = sphi 0, %s52
      %s54 = sphi 0, %s52
      %s55 = sphi 0, %s54
      %s69 = sphi 0, %s55
      %s73 = sphi 0, %s73
      %s75 = sphi 0, %s73
      %s76 = sphi 0, %s75
      %s90 = sphi 0, %s76
      %s94 = sphi 0, %s94
      %s96 = sphi 0, %s94
      %s97 = sphi 0, %s96
      %s111 = sphi 0, %s97
      %s115 = sphi 0, %s115
      %s117 = sphi 0, %s115
      %s118 = sphi 0, %s117
      %s132 = sphi 0, %s118
      %s136 = sphi 0, %s136
      %s138 = sphi 0, %s136
      %s139 = sphi 0, %s138
      %s153 = sphi 0, %s139
      %s157 = sphi 0, %s157
      %s159 = sphi 0, %s157
      %s160 = sphi 0, %s159
      %s174 = sphi 0, %s160
      %s178 = sphi 0, %s178
      %s180 = sphi 0, %s178
      %s181 = sphi 0, %s180
      %s195 = sphi 0, %s181
      %s199 = sphi 0, %s199
      %s201 = sphi 0, %s199
      %s202 = sphi 0, %s201
      %s216 = sphi 0, %s202
      %s222 = sphi 0, %s224
      %s225 = sphi 0, %s222
      %s226 = sphi 0, %s225
      %s242 = sphi 0, %s226
    $region4: #{tpu_custom_call.1} parent=1 // loop_header_branch
      %21 = sbr.rel (%p19) target = $region8
    $region5: #{tpu_custom_call.1} parent=1 // loop_body
      %s23 = ssub.s32 %s18, 1
      %s24 = ssub.s32 %s18, 2
      %s25 = sadd.s32 %s18, 1
      %s26 = ssub.s32 %s18, %s25
      %p27 = scmp.eq.s32.totalorder %s26, 0
      %s29 = sadd.s32 %s28, 1
      %s30 = scalar_select %p27, %s28, %s29
      %p33 = pneg %p27
      %p34 = scmp.eq.s32.totalorder %s18, 1
      %p35 = por %p33, %p34
      %p36 = scmp.ne.s32.totalorder %s28, %s31
      %p37 = scmp.eq.s32.totalorder %s18, 0
      %p38 = por %p36, %p37
      %p39 = scmp.ne.s32.totalorder %s28, %s31
      %p40 = scmp.eq.s32.totalorder %s23, 1
      %p41 = por %p39, %p40
      %p42 = scmp.ne.s32.totalorder %s31, %s32
      %p43 = scmp.eq.s32.totalorder %s23, 0
      %p44 = por %p42, %p43
      %p45 = scmp.ne.s32.totalorder %s31, %s32
      %p46 = scmp.eq.s32.totalorder %s24, 1
      %p47 = por %p45, %p46
      %p49 = scmp.ne.s32.totalorder %s32, %s48
      %p50 = scmp.eq.s32.totalorder %s24, 0
      %p51 = por %p49, %p50
      %s53 = sadd.s32 %s52, 1
      %p56 = scmp.eq.s32.totalorder %s18, 1
      %p57 = scmp.ne.s32.totalorder %s52, %s54
      %p58 = scmp.eq.s32.totalorder %s18, 0
      %p59 = por %p57, %p58
      %p60 = scmp.ne.s32.totalorder %s52, %s54
      %p61 = scmp.eq.s32.totalorder %s23, 1
      %p62 = por %p60, %p61
      %p63 = scmp.ne.s32.totalorder %s54, %s55
      %p64 = scmp.eq.s32.totalorder %s23, 0
      %p65 = por %p63, %p64
      %p66 = scmp.ne.s32.totalorder %s54, %s55
      %p67 = scmp.eq.s32.totalorder %s24, 1
      %p68 = por %p66, %p67
      %p70 = scmp.ne.s32.totalorder %s55, %s69
      %p71 = scmp.eq.s32.totalorder %s24, 0
      %p72 = por %p70, %p71
      %s74 = sadd.s32 %s73, 1
      %p77 = scmp.eq.s32.totalorder %s18, 1
      %p78 = scmp.ne.s32.totalorder %s73, %s75
      %p79 = scmp.eq.s32.totalorder %s18, 0
      %p80 = por %p78, %p79
      %p81 = scmp.ne.s32.totalorder %s73, %s75
      %p82 = scmp.eq.s32.totalorder %s23, 1
      %p83 = por %p81, %p82
      %p84 = scmp.ne.s32.totalorder %s75, %s76
      %p85 = scmp.eq.s32.totalorder %s23, 0
      %p86 = por %p84, %p85
      %p87 = scmp.ne.s32.totalorder %s75, %s76
      %p88 = scmp.eq.s32.totalorder %s24, 1
      %p89 = por %p87, %p88
      %p91 = scmp.ne.s32.totalorder %s76, %s90
      %p92 = scmp.eq.s32.totalorder %s24, 0
      %p93 = por %p91, %p92
      %s95 = sadd.s32 %s94, 1
      %p98 = scmp.eq.s32.totalorder %s18, 1
      %p99 = scmp.ne.s32.totalorder %s94, %s96
      %p100 = scmp.eq.s32.totalorder %s18, 0
      %p101 = por %p99, %p100
      %p102 = scmp.ne.s32.totalorder %s94, %s96
      %p103 = scmp.eq.s32.totalorder %s23, 1
      %p104 = por %p102, %p103
      %p105 = scmp.ne.s32.totalorder %s96, %s97
      %p106 = scmp.eq.s32.totalorder %s23, 0
      %p107 = por %p105, %p106
      %p108 = scmp.ne.s32.totalorder %s96, %s97
      %p109 = scmp.eq.s32.totalorder %s24, 1
      %p110 = por %p108, %p109
      %p112 = scmp.ne.s32.totalorder %s97, %s111
      %p113 = scmp.eq.s32.totalorder %s24, 0
      %p114 = por %p112, %p113
      %s116 = sadd.s32 %s115, 1
      %p119 = scmp.eq.s32.totalorder %s18, 1
      %p120 = scmp.ne.s32.totalorder %s115, %s117
      %p121 = scmp.eq.s32.totalorder %s18, 0
      %p122 = por %p120, %p121
      %p123 = scmp.ne.s32.totalorder %s115, %s117
      %p124 = scmp.eq.s32.totalorder %s23, 1
      %p125 = por %p123, %p124
      %p126 = scmp.ne.s32.totalorder %s117, %s118
      %p127 = scmp.eq.s32.totalorder %s23, 0
      %p128 = por %p126, %p127
      %p129 = scmp.ne.s32.totalorder %s117, %s118
      %p130 = scmp.eq.s32.totalorder %s24, 1
      %p131 = por %p129, %p130
      %p133 = scmp.ne.s32.totalorder %s118, %s132
      %p134 = scmp.eq.s32.totalorder %s24, 0
      %p135 = por %p133, %p134
      %s137 = sadd.s32 %s136, 1
      %p140 = scmp.eq.s32.totalorder %s18, 1
      %p141 = scmp.ne.s32.totalorder %s136, %s138
      %p142 = scmp.eq.s32.totalorder %s18, 0
      %p143 = por %p141, %p142
      %p144 = scmp.ne.s32.totalorder %s136, %s138
      %p145 = scmp.eq.s32.totalorder %s23, 1
      %p146 = por %p144, %p145
      %p147 = scmp.ne.s32.totalorder %s138, %s139
      %p148 = scmp.eq.s32.totalorder %s23, 0
      %p149 = por %p147, %p148
      %p150 = scmp.ne.s32.totalorder %s138, %s139
      %p151 = scmp.eq.s32.totalorder %s24, 1
      %p152 = por %p150, %p151
      %p154 = scmp.ne.s32.totalorder %s139, %s153
      %p155 = scmp.eq.s32.totalorder %s24, 0
      %p156 = por %p154, %p155
      %s158 = sadd.s32 %s157, 1
      %p161 = scmp.eq.s32.totalorder %s18, 1
      %p162 = scmp.ne.s32.totalorder %s157, %s159
      %p163 = scmp.eq.s32.totalorder %s18, 0
      %p164 = por %p162, %p163
      %p165 = scmp.ne.s32.totalorder %s157, %s159
      %p166 = scmp.eq.s32.totalorder %s23, 1
      %p167 = por %p165, %p166
      %p168 = scmp.ne.s32.totalorder %s159, %s160
      %p169 = scmp.eq.s32.totalorder %s23, 0
      %p170 = por %p168, %p169
      %p171 = scmp.ne.s32.totalorder %s159, %s160
      %p172 = scmp.eq.s32.totalorder %s24, 1
      %p173 = por %p171, %p172
      %p175 = scmp.ne.s32.totalorder %s160, %s174
      %p176 = scmp.eq.s32.totalorder %s24, 0
      %p177 = por %p175, %p176
      %s179 = sadd.s32 %s178, 1
      %p182 = scmp.eq.s32.totalorder %s18, 1
      %p183 = scmp.ne.s32.totalorder %s178, %s180
      %p184 = scmp.eq.s32.totalorder %s18, 0
      %p185 = por %p183, %p184
      %p186 = scmp.ne.s32.totalorder %s178, %s180
      %p187 = scmp.eq.s32.totalorder %s23, 1
      %p188 = por %p186, %p187
      %p189 = scmp.ne.s32.totalorder %s180, %s181
      %p190 = scmp.eq.s32.totalorder %s23, 0
      %p191 = por %p189, %p190
      %p192 = scmp.ne.s32.totalorder %s180, %s181
      %p193 = scmp.eq.s32.totalorder %s24, 1
      %p194 = por %p192, %p193
      %p196 = scmp.ne.s32.totalorder %s181, %s195
      %p197 = scmp.eq.s32.totalorder %s24, 0
      %p198 = por %p196, %p197
      %s200 = sadd.s32 %s199, 1
      %p203 = scmp.eq.s32.totalorder %s18, 1
      %p204 = scmp.ne.s32.totalorder %s199, %s201
      %p205 = scmp.eq.s32.totalorder %s18, 0
      %p206 = por %p204, %p205
      %p207 = scmp.ne.s32.totalorder %s199, %s201
      %p208 = scmp.eq.s32.totalorder %s23, 1
      %p209 = por %p207, %p208
      %p210 = scmp.ne.s32.totalorder %s201, %s202
      %p211 = scmp.eq.s32.totalorder %s23, 0
      %p212 = por %p210, %p211
      %p213 = scmp.ne.s32.totalorder %s201, %s202
      %p214 = scmp.eq.s32.totalorder %s24, 1
      %p215 = por %p213, %p214
      %p217 = scmp.ne.s32.totalorder %s202, %s216
      %p218 = scmp.eq.s32.totalorder %s24, 0
      %p219 = por %p217, %p218
      %s220 = ssub.s32 %s18, %s25
      %p221 = scmp.eq.s32.totalorder %s220, 0
      %s223 = sadd.s32 %s222, 1
      %s224 = scalar_select %p221, %s222, %s223
      %p227 = pneg %p221
      %p228 = scmp.eq.s32.totalorder %s18, 1
      %p229 = por %p227, %p228
      %p230 = scmp.ne.s32.totalorder %s222, %s225
      %p231 = scmp.eq.s32.totalorder %s18, 0
      %p232 = por %p230, %p231
      %p233 = scmp.ne.s32.totalorder %s222, %s225
      %p234 = scmp.eq.s32.totalorder %s23, 1
      %p235 = por %p233, %p234
      %p236 = scmp.ne.s32.totalorder %s225, %s226
      %p237 = scmp.eq.s32.totalorder %s23, 0
      %p238 = por %p236, %p237
      %p239 = scmp.ne.s32.totalorder %s225, %s226
      %p240 = scmp.eq.s32.totalorder %s24, 1
      %p241 = por %p239, %p240
      %p243 = scmp.ne.s32.totalorder %s226, %s242
      %p244 = scmp.eq.s32.totalorder %s24, 0
      %p245 = por %p243, %p244
      %p246 = scmp.le.s32.totalorder 1, %s18
      %p247 = scmp.lt.s32.totalorder %s18, 3
      %p248 = pnand %p246, %p247
      %p249 = pneg %p248
      // Predicated region
      $region9: #{tpu_custom_call.1} parent=5 // pred_check
        _
      $region10: #{tpu_custom_call.1} parent=5 // pred_check_branch
        %251 = sbr.rel (%p248) target = $region12
      $region11: #{tpu_custom_call.1} parent=5 // pred_region
        %s252 = ssub.s32 %s18, 1
        // Predicated region
        $region13: #{tpu_custom_call.1} parent=11 // pred_check
          %p253 = pneg %p65
        $region14: #{tpu_custom_call.1} parent=11 // pred_check_branch
          %255 = sbr.rel (%p253) target = $region16
        $region15: #{tpu_custom_call.1} parent=11 // pred_region
          _
        $region16: #{tpu_custom_call.1} parent=11 // pred_fallthru
          _
        // Predicated region
        $region17: #{tpu_custom_call.1} parent=11 // pred_check
          %p256 = pneg %p86
        $region18: #{tpu_custom_call.1} parent=11 // pred_check_branch
          %258 = sbr.rel (%p256) target = $region20
        $region19: #{tpu_custom_call.1} parent=11 // pred_region
          _
        $region20: #{tpu_custom_call.1} parent=11 // pred_fallthru
          _
        // Predicated region
        $region21: #{tpu_custom_call.1} parent=11 // pred_check
          %p259 = pneg %p107
        $region22: #{tpu_custom_call.1} parent=11 // pred_check_branch
          %261 = sbr.rel (%p259) target = $region24
        $region23: #{tpu_custom_call.1} parent=11 // pred_region
          _
        $region24: #{tpu_custom_call.1} parent=11 // pred_fallthru
          _
        // Predicated region
        $region25: #{tpu_custom_call.1} parent=11 // pred_check
          %p262 = pneg %p128
        $region26: #{tpu_custom_call.1} parent=11 // pred_check_branch
          %264 = sbr.rel (%p262) target = $region28
        $region27: #{tpu_custom_call.1} parent=11 // pred_region
          _
        $region28: #{tpu_custom_call.1} parent=11 // pred_fallthru
          _
        // Predicated region
        $region29: #{tpu_custom_call.1} parent=11 // pred_check
          %p265 = pneg %p149
        $region30: #{tpu_custom_call.1} parent=11 // pred_check_branch
          %267 = sbr.rel (%p265) target = $region32
        $region31: #{tpu_custom_call.1} parent=11 // pred_region
          _
        $region32: #{tpu_custom_call.1} parent=11 // pred_fallthru
          _
        // Predicated region
        $region33: #{tpu_custom_call.1} parent=11 // pred_check
          %p268 = pneg %p170
        $region34: #{tpu_custom_call.1} parent=11 // pred_check_branch
          %270 = sbr.rel (%p268) target = $region36
        $region35: #{tpu_custom_call.1} parent=11 // pred_region
          _
        $region36: #{tpu_custom_call.1} parent=11 // pred_fallthru
          _
        // Predicated region
        $region37: #{tpu_custom_call.1} parent=11 // pred_check
          %p271 = pneg %p191
        $region38: #{tpu_custom_call.1} parent=11 // pred_check_branch
          %273 = sbr.rel (%p271) target = $region40
        $region39: #{tpu_custom_call.1} parent=11 // pred_region
          _
        $region40: #{tpu_custom_call.1} parent=11 // pred_fallthru
          _
        // Predicated region
        $region41: #{tpu_custom_call.1} parent=11 // pred_check
          %p274 = pneg %p212
        $region42: #{tpu_custom_call.1} parent=11 // pred_check_branch
          %276 = sbr.rel (%p274) target = $region44
        $region43: #{tpu_custom_call.1} parent=11 // pred_region
          _
        $region44: #{tpu_custom_call.1} parent=11 // pred_fallthru
          _
      $region12: #{tpu_custom_call.1} parent=5 // pred_fallthru
        _
      %p277 = scmp.lt.s32.totalorder %s18, 2
      // Predicated region
      $region45: #{tpu_custom_call.1} parent=5 // pred_check
        %p278 = pneg %p277
      $region46: #{tpu_custom_call.1} parent=5 // pred_check_branch
        %280 = sbr.rel (%p278) target = $region48
      $region47: #{tpu_custom_call.1} parent=5 // pred_region
        // Predicated region
        $region49: #{tpu_custom_call.1} parent=47 // pred_check
          %p281 = pneg %p38
        $region50: #{tpu_custom_call.1} parent=47 // pred_check_branch
          %283 = sbr.rel (%p281) target = $region52
        $region51: #{tpu_custom_call.1} parent=47 // pred_region
          %s284 = smul.u32 2, %s18
          %p285 = scmp.lt.s32.totalorder %s284, 3
          %s286 = scalar_select %p285, %s284, 3
          %s287 = smul.addr %s286, 8
          %s288 = scalar_lea.vmem %s0, %s287
          %s289 = smul.u32 2, %s18
        $region52: #{tpu_custom_call.1} parent=47 // pred_fallthru
          _
      $region48: #{tpu_custom_call.1} parent=5 // pred_fallthru
        _
      %p290 = scmp.le.s32.totalorder 1, %s18
      %p291 = scmp.lt.s32.totalorder %s18, 3
      %p292 = pnand %p290, %p291
      %p293 = pneg %p292
      // Predicated region
      $region53: #{tpu_custom_call.1} parent=5 // pred_check
        _
      $region54: #{tpu_custom_call.1} parent=5 // pred_check_branch
        %295 = sbr.rel (%p292) target = $region56
      $region55: #{tpu_custom_call.1} parent=5 // pred_region
        %s296 = ssub.s32 %s18, 1
        %s297 = smul.u32 2, %s23
        %p298 = scmp.lt.s32.totalorder %s297, 3
        %s299 = scalar_select %p298, %s297, 3
        %s300 = smul.addr %s299, 8
        %s301 = scalar_lea.vmem %s0, %s300
        %p302 = pneg %p44
        %p303 = pneg %p41
        %p304 = pneg %p65
        %p305 = pneg %p62
        %p306 = pneg %p86
        %p307 = pneg %p83
        %p308 = pneg %p107
        %p309 = pneg %p104
        %p310 = pneg %p128
        %p311 = pneg %p125
        %p312 = pneg %p149
        %p313 = pneg %p146
        %p314 = pneg %p170
        %p315 = pneg %p167
        %p316 = pneg %p191
        %p317 = pneg %p188
        %p318 = pneg %p212
        %p319 = pneg %p209
        %p320 = pneg %p238
        %p321 = pneg %p235
        %s322 = sand.u32 %s225, 1
        %s323 = scalar_lea.sflag [#allocation3], %s322
        %s324 = sand.u32 %s225, 1
        %s325 = smul.addr %s324, 16
        %s326 = scalar_lea.vmem [#allocation2], %s325
        %s327 = smul.u32 2, %s23
        %p328 = scmp.lt.s32.totalorder %s327, 3
        %s329 = scalar_select %p328, %s327, 3
        %s330 = smul.addr %s329, 8
        %s331 = scalar_lea.vmem %s0, %s330
        %s332 = smul.u32 2, %s23
        %s333 = smul.u32 2, %s23
        %v334 = vld [vmem:[%s1] sm:$0x3]
        %v335 = vld [vmem:[%s2] sm:$0xff]
        %v336 = vld [vmem:[%s2 + $0x8] sm:$0xff]
        %v337 = vld [vmem:[%s331] sm:$0xff]
        %v338 = vld [vmem:[%s331 + $0x8] sm:$0xff]
        %v339 = vld [vmem:[%s3] sm:$0xf]
        %s340 = scalar_lea.vmem %s3, 4
        %v341 = vld [vmem:[%s340] sm:$0xf]
        %vm342 = vcmask 31744
        %v344 = vsel %vm342, %v337, 0
        %v347 = vsel %vm342, %v338, 0
        %vm349 = vcmask 1043456
        %v351 = vsel %vm349, %v341, 0
        %353 = vmatprep.subr.mxu0 0.0
        %354 = vmatpush1.msra.mxu0 0.0
        %355 = vmatprep.subr.mxu0 0.0
        %356 = vmatpush1.msra.mxu0 0.0
        %357 = vmatprep.subr.mxu0 0.0
        %358 = vmatpush1.msra.mxu0 0.0
        %359 = vmatprep.subr.mxu0 0.0
        %360 = vmatpush1.msra.mxu0 0.0
        %361 = vmatprep.subr.mxu0 0.0
        %362 = vmatpush1.msra.mxu0 0.0
        %363 = vmatprep.subr.mxu0 0.0
        %364 = vmatpush1.msra.mxu0 0.0
        %365 = vmatprep.subr.mxu0 0.0
        %366 = vmatpush1.msra.mxu0 0.0
        %367 = vmatprep.subr.mxu0 0.0
        %368 = vmatpush1.msra.mxu0 0.0
        %369 = vmatprep.subr.mxu0 0.0
        %370 = vmatpush1.msra.mxu0 0.0
        %371 = vmatprep.subr.mxu0 0.0
        %372 = vmatpush1.msra.mxu0 0.0
        %373 = vmatprep.subr.mxu0 0.0
        %374 = vmatpush1.msra.mxu0 0.0
        %375 = vmatprep.subr.mxu0 0.0
        %376 = vmatpush1.msra.mxu0 0.0
        %377 = vmatprep.subr.mxu0 0.0
        %378 = vmatpush1.msra.mxu0 0.0
        %379 = vmatprep.subr.mxu0 0.0
        %380 = vmatpush1.msra.mxu0 0.0
        %381 = vmatprep.subr.mxu0 0.0
        %382 = vmatpush1.msra.mxu0 0.0
        %383 = vmatprep.subr.mxu0 0.0
        %384 = vmatpush1.msra.mxu0 %v351
        %385 = vmatprep.subr.mxu0 0.0
        %386 = vmatpush2.msra.mxu0 0.0
        %387 = vmatprep.subr.mxu0 0.0
        %388 = vmatpush2.msra.mxu0 0.0
        %389 = vmatprep.subr.mxu0 0.0
        %390 = vmatpush2.msra.mxu0 0.0
        %391 = vmatprep.subr.mxu0 0.0
        %392 = vmatpush2.msra.mxu0 0.0
        %393 = vmatprep.subr.mxu0 0.0
        %394 = vmatpush2.msra.mxu0 0.0
        %395 = vmatprep.subr.mxu0 0.0
        %396 = vmatpush2.msra.mxu0 0.0
        %397 = vmatprep.subr.mxu0 0.0
        %398 = vmatpush2.msra.mxu0 0.0
        %399 = vmatprep.subr.mxu0 0.0
        %400 = vmatpush2.msra.mxu0 0.0
        %401 = vmatprep.subr.mxu0 0.0
        %402 = vmatpush2.msra.mxu0 0.0
        %403 = vmatprep.subr.mxu0 0.0
        %404 = vmatpush2.msra.mxu0 0.0
        %405 = vmatprep.subr.mxu0 0.0
        %406 = vmatpush2.msra.mxu0 0.0
        %407 = vmatprep.subr.mxu0 0.0
        %408 = vmatpush2.msra.mxu0 0.0
        %409 = vmatprep.subr.mxu0 0.0
        %410 = vmatpush2.msra.mxu0 0.0
        %411 = vmatprep.subr.mxu0 0.0
        %412 = vmatpush2.msra.mxu0 0.0
        %413 = vmatprep.subr.mxu0 0.0
        %414 = vmatpush2.msra.mxu0 0.0
        %415 = vmatprep.subr.mxu0 0.0
        %416 = vmatpush2.msra.mxu0 0.0
        %417 = vmatprep.mubr.f32.mxu0 0.0
        %418 = vmatmul.mubr.f32.gmra.mxu0 %v344
        %v419 = vpop.f32.mrf.mxu0
        %v420 = vadd.f32 0.0, %v419
        %v421 = vpop.f32.mrf.mxu0
        %422 = vmatprep.mubr.f32.mxu0 0.0
        %423 = vmatmul.mubr.f32.gmra.mxu0 %v347
        %v424 = vpop.f32.mrf.mxu0
        %v425 = vadd.f32 0.0, %v424
        %v426 = vpop.f32.mrf.mxu0
        %427 = vdwg.mxu0
        %vm428 = vcmask 130048
        %v430 = vsel %vm428, %v334, 0
        %432 = vmatprep.subr.mxu0 0.0
        %433 = vmatpush1.msra.mxu0 0.0
        %434 = vmatprep.subr.mxu0 0.0
        %435 = vmatpush1.msra.mxu0 0.0
        %436 = vmatprep.subr.mxu0 0.0
        %437 = vmatpush1.msra.mxu0 0.0
        %438 = vmatprep.subr.mxu0 0.0
        %439 = vmatpush1.msra.mxu0 0.0
        %440 = vmatprep.subr.mxu0 0.0
        %441 = vmatpush1.msra.mxu0 0.0
        %442 = vmatprep.subr.mxu0 0.0
        %443 = vmatpush1.msra.mxu0 0.0
        %444 = vmatprep.subr.mxu0 0.0
        %445 = vmatpush1.msra.mxu0 0.0
        %446 = vmatprep.subr.mxu0 0.0
        %447 = vmatpush1.msra.mxu0 0.0
        %448 = vmatprep.subr.mxu0 0.0
        %449 = vmatpush1.msra.mxu0 0.0
        %450 = vmatprep.subr.mxu0 0.0
        %451 = vmatpush1.msra.mxu0 0.0
        %452 = vmatprep.subr.mxu0 0.0
        %453 = vmatpush1.msra.mxu0 0.0
        %454 = vmatprep.subr.mxu0 0.0
        %455 = vmatpush1.msra.mxu0 0.0
        %456 = vmatprep.subr.mxu0 0.0
        %457 = vmatpush1.msra.mxu0 0.0
        %458 = vmatprep.subr.mxu0 0.0
        %459 = vmatpush1.msra.mxu0 0.0
        %460 = vmatprep.subr.mxu0 0.0
        %461 = vmatpush1.msra.mxu0 %v425
        %462 = vmatprep.subr.mxu0 0.0
        %463 = vmatpush1.msra.mxu0 %v420
        %464 = vmatprep.subr.mxu0 0.0
        %465 = vmatpush2.msra.mxu0 0.0
        %466 = vmatprep.subr.mxu0 0.0
        %467 = vmatpush2.msra.mxu0 0.0
        %468 = vmatprep.subr.mxu0 0.0
        %469 = vmatpush2.msra.mxu0 0.0
        %470 = vmatprep.subr.mxu0 0.0
        %471 = vmatpush2.msra.mxu0 0.0
        %472 = vmatprep.subr.mxu0 0.0
        %473 = vmatpush2.msra.mxu0 0.0
        %474 = vmatprep.subr.mxu0 0.0
        %475 = vmatpush2.msra.mxu0 0.0
        %476 = vmatprep.subr.mxu0 0.0
        %477 = vmatpush2.msra.mxu0 0.0
        %478 = vmatprep.subr.mxu0 0.0
        %479 = vmatpush2.msra.mxu0 0.0
        %480 = vmatprep.subr.mxu0 0.0
        %481 = vmatpush2.msra.mxu0 0.0
        %482 = vmatprep.subr.mxu0 0.0
        %483 = vmatpush2.msra.mxu0 0.0
        %484 = vmatprep.subr.mxu0 0.0
        %485 = vmatpush2.msra.mxu0 0.0
        %486 = vmatprep.subr.mxu0 0.0
        %487 = vmatpush2.msra.mxu0 0.0
        %488 = vmatprep.subr.mxu0 0.0
        %489 = vmatpush2.msra.mxu0 0.0
        %490 = vmatprep.subr.mxu0 0.0
        %491 = vmatpush2.msra.mxu0 0.0
        %492 = vmatprep.subr.mxu0 0.0
        %493 = vmatpush2.msra.mxu0 0.0
        %494 = vmatprep.subr.mxu0 0.0
        %495 = vmatpush2.msra.mxu0 0.0
        %496 = vmatprep.mubr.f32.mxu0 0.0
        %497 = vmatmul.mubr.f32.gmra.mxu0 %v430
        %v498 = vpop.f32.mrf.mxu0
        %v499 = vadd.f32 0.0, %v498
        %v500 = vpop.f32.mrf.mxu0
        %501 = vdwg.mxu0
        %vm502 = vcmask 15360
        %v504 = vsel %vm502, %v335, 0
        %v507 = vsel %vm502, %v336, 0
        %vm509 = vcmask 1041408
        %v511 = vsel %vm509, %v499, 0
        %513 = vmatprep.subr.mxu0 0.0
        %514 = vmatpush1.msra.mxu0 0.0
        %515 = vmatprep.subr.mxu0 0.0
        %516 = vmatpush1.msra.mxu0 0.0
        %517 = vmatprep.subr.mxu0 0.0
        %518 = vmatpush1.msra.mxu0 0.0
        %519 = vmatprep.subr.mxu0 0.0
        %520 = vmatpush1.msra.mxu0 0.0
        %521 = vmatprep.subr.mxu0 0.0
        %522 = vmatpush1.msra.mxu0 0.0
        %523 = vmatprep.subr.mxu0 0.0
        %524 = vmatpush1.msra.mxu0 0.0
        %525 = vmatprep.subr.mxu0 0.0
        %526 = vmatpush1.msra.mxu0 0.0
        %527 = vmatprep.subr.mxu0 0.0
        %528 = vmatpush1.msra.mxu0 0.0
        %529 = vmatprep.subr.mxu0 0.0
        %530 = vmatpush1.msra.mxu0 0.0
        %531 = vmatprep.subr.mxu0 0.0
        %532 = vmatpush1.msra.mxu0 0.0
        %533 = vmatprep.subr.mxu0 0.0
        %534 = vmatpush1.msra.mxu0 0.0
        %535 = vmatprep.subr.mxu0 0.0
        %536 = vmatpush1.msra.mxu0 0.0
        %537 = vmatprep.subr.mxu0 0.0
        %538 = vmatpush1.msra.mxu0 0.0
        %539 = vmatprep.subr.mxu0 0.0
        %540 = vmatpush1.msra.mxu0 0.0
        %541 = vmatprep.subr.mxu0 0.0
        %542 = vmatpush1.msra.mxu0 0.0
        %543 = vmatprep.subr.mxu0 0.0
        %544 = vmatpush1.msra.mxu0 %v511
        %545 = vmatprep.subr.mxu0 0.0
        %546 = vmatpush2.msra.mxu0 0.0
        %547 = vmatprep.subr.mxu0 0.0
        %548 = vmatpush2.msra.mxu0 0.0
        %549 = vmatprep.subr.mxu0 0.0
        %550 = vmatpush2.msra.mxu0 0.0
        %551 = vmatprep.subr.mxu0 0.0
        %552 = vmatpush2.msra.mxu0 0.0
        %553 = vmatprep.subr.mxu0 0.0
        %554 = vmatpush2.msra.mxu0 0.0
        %555 = vmatprep.subr.mxu0 0.0
        %556 = vmatpush2.msra.mxu0 0.0
        %557 = vmatprep.subr.mxu0 0.0
        %558 = vmatpush2.msra.mxu0 0.0
        %559 = vmatprep.subr.mxu0 0.0
        %560 = vmatpush2.msra.mxu0 0.0
        %561 = vmatprep.subr.mxu0 0.0
        %562 = vmatpush2.msra.mxu0 0.0
        %563 = vmatprep.subr.mxu0 0.0
        %564 = vmatpush2.msra.mxu0 0.0
        %565 = vmatprep.subr.mxu0 0.0
        %566 = vmatpush2.msra.mxu0 0.0
        %567 = vmatprep.subr.mxu0 0.0
        %568 = vmatpush2.msra.mxu0 0.0
        %569 = vmatprep.subr.mxu0 0.0
        %570 = vmatpush2.msra.mxu0 0.0
        %571 = vmatprep.subr.mxu0 0.0
        %572 = vmatpush2.msra.mxu0 0.0
        %573 = vmatprep.subr.mxu0 0.0
        %574 = vmatpush2.msra.mxu0 0.0
        %575 = vmatprep.subr.mxu0 0.0
        %576 = vmatpush2.msra.mxu0 0.0
        %577 = vmatprep.mubr.f32.mxu0 0.0
        %578 = vmatmul.mubr.f32.gmra.mxu0 %v504
        %v579 = vpop.f32.mrf.mxu0
        %v580 = vadd.f32 0.0, %v579
        %v581 = vpop.f32.mrf.mxu0
        %582 = vmatprep.mubr.f32.mxu0 0.0
        %583 = vmatmul.mubr.f32.gmra.mxu0 %v507
        %v584 = vpop.f32.mrf.mxu0
        %v585 = vadd.f32 0.0, %v584
        %v586 = vpop.f32.mrf.mxu0
        %587 = vdwg.mxu0
        %v589 = vsel %vm349, %v339, 0
        %591 = vmatprep.subr.mxu0 0.0
        %592 = vmatpush1.msra.mxu0 0.0
        %593 = vmatprep.subr.mxu0 0.0
        %594 = vmatpush1.msra.mxu0 0.0
        %595 = vmatprep.subr.mxu0 0.0
        %596 = vmatpush1.msra.mxu0 0.0
        %597 = vmatprep.subr.mxu0 0.0
        %598 = vmatpush1.msra.mxu0 0.0
        %599 = vmatprep.subr.mxu0 0.0
        %600 = vmatpush1.msra.mxu0 0.0
        %601 = vmatprep.subr.mxu0 0.0
        %602 = vmatpush1.msra.mxu0 0.0
        %603 = vmatprep.subr.mxu0 0.0
        %604 = vmatpush1.msra.mxu0 0.0
        %605 = vmatprep.subr.mxu0 0.0
        %606 = vmatpush1.msra.mxu0 0.0
        %607 = vmatprep.subr.mxu0 0.0
        %608 = vmatpush1.msra.mxu0 0.0
        %609 = vmatprep.subr.mxu0 0.0
        %610 = vmatpush1.msra.mxu0 0.0
        %611 = vmatprep.subr.mxu0 0.0
        %612 = vmatpush1.msra.mxu0 0.0
        %613 = vmatprep.subr.mxu0 0.0
        %614 = vmatpush1.msra.mxu0 0.0
        %615 = vmatprep.subr.mxu0 0.0
        %616 = vmatpush1.msra.mxu0 0.0
        %617 = vmatprep.subr.mxu0 0.0
        %618 = vmatpush1.msra.mxu0 0.0
        %619 = vmatprep.subr.mxu0 0.0
        %620 = vmatpush1.msra.mxu0 0.0
        %621 = vmatprep.subr.mxu0 0.0
        %622 = vmatpush1.msra.mxu0 %v589
        %623 = vmatprep.subr.mxu0 0.0
        %624 = vmatpush2.msra.mxu0 0.0
        %625 = vmatprep.subr.mxu0 0.0
        %626 = vmatpush2.msra.mxu0 0.0
        %627 = vmatprep.subr.mxu0 0.0
        %628 = vmatpush2.msra.mxu0 0.0
        %629 = vmatprep.subr.mxu0 0.0
        %630 = vmatpush2.msra.mxu0 0.0
        %631 = vmatprep.subr.mxu0 0.0
        %632 = vmatpush2.msra.mxu0 0.0
        %633 = vmatprep.subr.mxu0 0.0
        %634 = vmatpush2.msra.mxu0 0.0
        %635 = vmatprep.subr.mxu0 0.0
        %636 = vmatpush2.msra.mxu0 0.0
        %637 = vmatprep.subr.mxu0 0.0
        %638 = vmatpush2.msra.mxu0 0.0
        %639 = vmatprep.subr.mxu0 0.0
        %640 = vmatpush2.msra.mxu0 0.0
        %641 = vmatprep.subr.mxu0 0.0
        %642 = vmatpush2.msra.mxu0 0.0
        %643 = vmatprep.subr.mxu0 0.0
        %644 = vmatpush2.msra.mxu0 0.0
        %645 = vmatprep.subr.mxu0 0.0
        %646 = vmatpush2.msra.mxu0 0.0
        %647 = vmatprep.subr.mxu0 0.0
        %648 = vmatpush2.msra.mxu0 0.0
        %649 = vmatprep.subr.mxu0 0.0
        %650 = vmatpush2.msra.mxu0 0.0
        %651 = vmatprep.subr.mxu0 0.0
        %652 = vmatpush2.msra.mxu0 0.0
        %653 = vmatprep.subr.mxu0 0.0
        %654 = vmatpush2.msra.mxu0 0.0
        %655 = vmatprep.mubr.f32.mxu0 0.0
        %656 = vmatmul.mubr.f32.gmra.mxu0 %v344
        %v657 = vpop.f32.mrf.mxu0
        %v658 = vadd.f32 %v580, %v657
        %v659 = vpop.f32.mrf.mxu0
        %660 = vmatprep.mubr.f32.mxu0 0.0
        %661 = vmatmul.mubr.f32.gmra.mxu0 %v347
        %v662 = vpop.f32.mrf.mxu0
        %v663 = vadd.f32 %v585, %v662
        %v664 = vpop.f32.mrf.mxu0
        %665 = vdwg.mxu0
        %v666 = vld [vmem:[%s4] sm:$0xff]
        %v667 = vld [vmem:[%s4 + $0x8] sm:$0xff]
        %669 = vset.pattern.permute.xlu0 0
        %670 = vperm.xlu0 %669, %v666
        %v671 = vpop.permute.xlu0 %670
        %674 = vset.pattern.permute.xlu0 0
        %675 = vperm.xlu0 %674, %v667
        %v676 = vpop.permute.xlu0 %675
        %v678 = vadd.f32 %v658, %v671
        %v679 = vadd.f32 %v663, %v676
        %v680 = vmax.f32 %v678, 0.0
        %v681 = vmax.f32 %v679, 0.0
        %v682 = vld [vmem:[%s5] sm:$0xff]
        %s683 = scalar_lea.vmem %s5, 8
        %v684 = vld [vmem:[%s683] sm:$0xff]
        %vm685 = vcmask 64512
        %v687 = vsel %vm685, %v680, 0
        %v690 = vsel %vm685, %v681, 0
        %692 = vmatprep.subr.mxu0 0.0
        %693 = vmatpush1.msra.mxu0 0.0
        %694 = vmatprep.subr.mxu0 0.0
        %695 = vmatpush1.msra.mxu0 0.0
        %696 = vmatprep.subr.mxu0 0.0
        %697 = vmatpush1.msra.mxu0 0.0
        %698 = vmatprep.subr.mxu0 0.0
        %699 = vmatpush1.msra.mxu0 0.0
        %700 = vmatprep.subr.mxu0 0.0
        %701 = vmatpush1.msra.mxu0 0.0
        %702 = vmatprep.subr.mxu0 0.0
        %703 = vmatpush1.msra.mxu0 0.0
        %704 = vmatprep.subr.mxu0 0.0
        %705 = vmatpush1.msra.mxu0 0.0
        %706 = vmatprep.subr.mxu0 0.0
        %707 = vmatpush1.msra.mxu0 0.0
        %708 = vmatprep.subr.mxu0 0.0
        %709 = vmatpush1.msra.mxu0 0.0
        %710 = vmatprep.subr.mxu0 0.0
        %711 = vmatpush1.msra.mxu0 0.0
        %712 = vmatprep.subr.mxu0 0.0
        %713 = vmatpush1.msra.mxu0 0.0
        %714 = vmatprep.subr.mxu0 0.0
        %715 = vmatpush1.msra.mxu0 0.0
        %716 = vmatprep.subr.mxu0 0.0
        %717 = vmatpush1.msra.mxu0 0.0
        %718 = vmatprep.subr.mxu0 0.0
        %719 = vmatpush1.msra.mxu0 0.0
        %720 = vmatprep.subr.mxu0 0.0
        %721 = vmatpush1.msra.mxu0 0.0
        %722 = vmatprep.subr.mxu0 0.0
        %723 = vmatpush1.msra.mxu0 %v684
        %724 = vmatprep.subr.mxu0 0.0
        %725 = vmatpush2.msra.mxu0 0.0
        %726 = vmatprep.subr.mxu0 0.0
        %727 = vmatpush2.msra.mxu0 0.0
        %728 = vmatprep.subr.mxu0 0.0
        %729 = vmatpush2.msra.mxu0 0.0
        %730 = vmatprep.subr.mxu0 0.0
        %731 = vmatpush2.msra.mxu0 0.0
        %732 = vmatprep.subr.mxu0 0.0
        %733 = vmatpush2.msra.mxu0 0.0
        %734 = vmatprep.subr.mxu0 0.0
        %735 = vmatpush2.msra.mxu0 0.0
        %736 = vmatprep.subr.mxu0 0.0
        %737 = vmatpush2.msra.mxu0 0.0
        %738 = vmatprep.subr.mxu0 0.0
        %739 = vmatpush2.msra.mxu0 0.0
        %740 = vmatprep.subr.mxu0 0.0
        %741 = vmatpush2.msra.mxu0 0.0
        %742 = vmatprep.subr.mxu0 0.0
        %743 = vmatpush2.msra.mxu0 0.0
        %744 = vmatprep.subr.mxu0 0.0
        %745 = vmatpush2.msra.mxu0 0.0
        %746 = vmatprep.subr.mxu0 0.0
        %747 = vmatpush2.msra.mxu0 0.0
        %748 = vmatprep.subr.mxu0 0.0
        %749 = vmatpush2.msra.mxu0 0.0
        %750 = vmatprep.subr.mxu0 0.0
        %751 = vmatpush2.msra.mxu0 0.0
        %752 = vmatprep.subr.mxu0 0.0
        %753 = vmatpush2.msra.mxu0 0.0
        %754 = vmatprep.subr.mxu0 0.0
        %755 = vmatpush2.msra.mxu0 0.0
        %756 = vmatprep.mubr.f32.mxu0 0.0
        %757 = vmatmul.mubr.f32.gmra.mxu0 %v687
        %v758 = vpop.f32.mrf.mxu0
        %v759 = vadd.f32 0.0, %v758
        %v760 = vpop.f32.mrf.mxu0
        %761 = vmatprep.mubr.f32.mxu0 0.0
        %762 = vmatmul.mubr.f32.gmra.mxu0 %v690
        %v763 = vpop.f32.mrf.mxu0
        %v764 = vadd.f32 0.0, %v763
        %v765 = vpop.f32.mrf.mxu0
        %766 = vdwg.mxu0
        %767 = vmatprep.subr.mxu0 0.0
        %768 = vmatpush1.msra.mxu0 0.0
        %769 = vmatprep.subr.mxu0 0.0
        %770 = vmatpush1.msra.mxu0 0.0
        %771 = vmatprep.subr.mxu0 0.0
        %772 = vmatpush1.msra.mxu0 0.0
        %773 = vmatprep.subr.mxu0 0.0
        %774 = vmatpush1.msra.mxu0 0.0
        %775 = vmatprep.subr.mxu0 0.0
        %776 = vmatpush1.msra.mxu0 0.0
        %777 = vmatprep.subr.mxu0 0.0
        %778 = vmatpush1.msra.mxu0 0.0
        %779 = vmatprep.subr.mxu0 0.0
        %780 = vmatpush1.msra.mxu0 0.0
        %781 = vmatprep.subr.mxu0 0.0
        %782 = vmatpush1.msra.mxu0 0.0
        %783 = vmatprep.subr.mxu0 0.0
        %784 = vmatpush1.msra.mxu0 0.0
        %785 = vmatprep.subr.mxu0 0.0
        %786 = vmatpush1.msra.mxu0 0.0
        %787 = vmatprep.subr.mxu0 0.0
        %788 = vmatpush1.msra.mxu0 0.0
        %789 = vmatprep.subr.mxu0 0.0
        %790 = vmatpush1.msra.mxu0 0.0
        %791 = vmatprep.subr.mxu0 0.0
        %792 = vmatpush1.msra.mxu0 0.0
        %793 = vmatprep.subr.mxu0 0.0
        %794 = vmatpush1.msra.mxu0 0.0
        %795 = vmatprep.subr.mxu0 0.0
        %796 = vmatpush1.msra.mxu0 %v764
        %797 = vmatprep.subr.mxu0 0.0
        %798 = vmatpush1.msra.mxu0 %v759
        %799 = vmatprep.subr.mxu0 0.0
        %800 = vmatpush2.msra.mxu0 0.0
        %801 = vmatprep.subr.mxu0 0.0
        %802 = vmatpush2.msra.mxu0 0.0
        %803 = vmatprep.subr.mxu0 0.0
        %804 = vmatpush2.msra.mxu0 0.0
        %805 = vmatprep.subr.mxu0 0.0
        %806 = vmatpush2.msra.mxu0 0.0
        %807 = vmatprep.subr.mxu0 0.0
        %808 = vmatpush2.msra.mxu0 0.0
        %809 = vmatprep.subr.mxu0 0.0
        %810 = vmatpush2.msra.mxu0 0.0
        %811 = vmatprep.subr.mxu0 0.0
        %812 = vmatpush2.msra.mxu0 0.0
        %813 = vmatprep.subr.mxu0 0.0
        %814 = vmatpush2.msra.mxu0 0.0
        %815 = vmatprep.subr.mxu0 0.0
        %816 = vmatpush2.msra.mxu0 0.0
        %817 = vmatprep.subr.mxu0 0.0
        %818 = vmatpush2.msra.mxu0 0.0
        %819 = vmatprep.subr.mxu0 0.0
        %820 = vmatpush2.msra.mxu0 0.0
        %821 = vmatprep.subr.mxu0 0.0
        %822 = vmatpush2.msra.mxu0 0.0
        %823 = vmatprep.subr.mxu0 0.0
        %824 = vmatpush2.msra.mxu0 0.0
        %825 = vmatprep.subr.mxu0 0.0
        %826 = vmatpush2.msra.mxu0 0.0
        %827 = vmatprep.subr.mxu0 0.0
        %828 = vmatpush2.msra.mxu0 0.0
        %829 = vmatprep.subr.mxu0 0.0
        %830 = vmatpush2.msra.mxu0 0.0
        %831 = vmatprep.mubr.f32.mxu0 0.0
        %832 = vmatmul.mubr.f32.gmra.mxu0 %v430
        %v833 = vpop.f32.mrf.mxu0
        %v834 = vadd.f32 0.0, %v833
        %v835 = vpop.f32.mrf.mxu0
        %836 = vdwg.mxu0
        %v838 = vsel %vm509, %v834, 0
        %840 = vmatprep.subr.mxu0 0.0
        %841 = vmatpush1.msra.mxu0 0.0
        %842 = vmatprep.subr.mxu0 0.0
        %843 = vmatpush1.msra.mxu0 0.0
        %844 = vmatprep.subr.mxu0 0.0
        %845 = vmatpush1.msra.mxu0 0.0
        %846 = vmatprep.subr.mxu0 0.0
        %847 = vmatpush1.msra.mxu0 0.0
        %848 = vmatprep.subr.mxu0 0.0
        %849 = vmatpush1.msra.mxu0 0.0
        %850 = vmatprep.subr.mxu0 0.0
        %851 = vmatpush1.msra.mxu0 0.0
        %852 = vmatprep.subr.mxu0 0.0
        %853 = vmatpush1.msra.mxu0 0.0
        %854 = vmatprep.subr.mxu0 0.0
        %855 = vmatpush1.msra.mxu0 0.0
        %856 = vmatprep.subr.mxu0 0.0
        %857 = vmatpush1.msra.mxu0 0.0
        %858 = vmatprep.subr.mxu0 0.0
        %859 = vmatpush1.msra.mxu0 0.0
        %860 = vmatprep.subr.mxu0 0.0
        %861 = vmatpush1.msra.mxu0 0.0
        %862 = vmatprep.subr.mxu0 0.0
        %863 = vmatpush1.msra.mxu0 0.0
        %864 = vmatprep.subr.mxu0 0.0
        %865 = vmatpush1.msra.mxu0 0.0
        %866 = vmatprep.subr.mxu0 0.0
        %867 = vmatpush1.msra.mxu0 0.0
        %868 = vmatprep.subr.mxu0 0.0
        %869 = vmatpush1.msra.mxu0 0.0
        %870 = vmatprep.subr.mxu0 0.0
        %871 = vmatpush1.msra.mxu0 %v838
        %872 = vmatprep.subr.mxu0 0.0
        %873 = vmatpush2.msra.mxu0 0.0
        %874 = vmatprep.subr.mxu0 0.0
        %875 = vmatpush2.msra.mxu0 0.0
        %876 = vmatprep.subr.mxu0 0.0
        %877 = vmatpush2.msra.mxu0 0.0
        %878 = vmatprep.subr.mxu0 0.0
        %879 = vmatpush2.msra.mxu0 0.0
        %880 = vmatprep.subr.mxu0 0.0
        %881 = vmatpush2.msra.mxu0 0.0
        %882 = vmatprep.subr.mxu0 0.0
        %883 = vmatpush2.msra.mxu0 0.0
        %884 = vmatprep.subr.mxu0 0.0
        %885 = vmatpush2.msra.mxu0 0.0
        %886 = vmatprep.subr.mxu0 0.0
        %887 = vmatpush2.msra.mxu0 0.0
        %888 = vmatprep.subr.mxu0 0.0
        %889 = vmatpush2.msra.mxu0 0.0
        %890 = vmatprep.subr.mxu0 0.0
        %891 = vmatpush2.msra.mxu0 0.0
        %892 = vmatprep.subr.mxu0 0.0
        %893 = vmatpush2.msra.mxu0 0.0
        %894 = vmatprep.subr.mxu0 0.0
        %895 = vmatpush2.msra.mxu0 0.0
        %896 = vmatprep.subr.mxu0 0.0
        %897 = vmatpush2.msra.mxu0 0.0
        %898 = vmatprep.subr.mxu0 0.0
        %899 = vmatpush2.msra.mxu0 0.0
        %900 = vmatprep.subr.mxu0 0.0
        %901 = vmatpush2.msra.mxu0 0.0
        %902 = vmatprep.subr.mxu0 0.0
        %903 = vmatpush2.msra.mxu0 0.0
        %904 = vmatprep.mubr.f32.mxu0 0.0
        %905 = vmatmul.mubr.f32.gmra.mxu0 %v504
        %v906 = vpop.f32.mrf.mxu0
        %v907 = vadd.f32 0.0, %v906
        %v908 = vpop.f32.mrf.mxu0
        %909 = vmatprep.mubr.f32.mxu0 0.0
        %910 = vmatmul.mubr.f32.gmra.mxu0 %v507
        %v911 = vpop.f32.mrf.mxu0
        %v912 = vadd.f32 0.0, %v911
        %v913 = vpop.f32.mrf.mxu0
        %914 = vdwg.mxu0
        %915 = vmatprep.subr.mxu0 0.0
        %916 = vmatpush1.msra.mxu0 0.0
        %917 = vmatprep.subr.mxu0 0.0
        %918 = vmatpush1.msra.mxu0 0.0
        %919 = vmatprep.subr.mxu0 0.0
        %920 = vmatpush1.msra.mxu0 0.0
        %921 = vmatprep.subr.mxu0 0.0
        %922 = vmatpush1.msra.mxu0 0.0
        %923 = vmatprep.subr.mxu0 0.0
        %924 = vmatpush1.msra.mxu0 0.0
        %925 = vmatprep.subr.mxu0 0.0
        %926 = vmatpush1.msra.mxu0 0.0
        %927 = vmatprep.subr.mxu0 0.0
        %928 = vmatpush1.msra.mxu0 0.0
        %929 = vmatprep.subr.mxu0 0.0
        %930 = vmatpush1.msra.mxu0 0.0
        %931 = vmatprep.subr.mxu0 0.0
        %932 = vmatpush1.msra.mxu0 0.0
        %933 = vmatprep.subr.mxu0 0.0
        %934 = vmatpush1.msra.mxu0 0.0
        %935 = vmatprep.subr.mxu0 0.0
        %936 = vmatpush1.msra.mxu0 0.0
        %937 = vmatprep.subr.mxu0 0.0
        %938 = vmatpush1.msra.mxu0 0.0
        %939 = vmatprep.subr.mxu0 0.0
        %940 = vmatpush1.msra.mxu0 0.0
        %941 = vmatprep.subr.mxu0 0.0
        %942 = vmatpush1.msra.mxu0 0.0
        %943 = vmatprep.subr.mxu0 0.0
        %944 = vmatpush1.msra.mxu0 0.0
        %945 = vmatprep.subr.mxu0 0.0
        %946 = vmatpush1.msra.mxu0 %v682
        %947 = vmatprep.subr.mxu0 0.0
        %948 = vmatpush2.msra.mxu0 0.0
        %949 = vmatprep.subr.mxu0 0.0
        %950 = vmatpush2.msra.mxu0 0.0
        %951 = vmatprep.subr.mxu0 0.0
        %952 = vmatpush2.msra.mxu0 0.0
        %953 = vmatprep.subr.mxu0 0.0
        %954 = vmatpush2.msra.mxu0 0.0
        %955 = vmatprep.subr.mxu0 0.0
        %956 = vmatpush2.msra.mxu0 0.0
        %957 = vmatprep.subr.mxu0 0.0
        %958 = vmatpush2.msra.mxu0 0.0
        %959 = vmatprep.subr.mxu0 0.0
        %960 = vmatpush2.msra.mxu0 0.0
        %961 = vmatprep.subr.mxu0 0.0
        %962 = vmatpush2.msra.mxu0 0.0
        %963 = vmatprep.subr.mxu0 0.0
        %964 = vmatpush2.msra.mxu0 0.0
        %965 = vmatprep.subr.mxu0 0.0
        %966 = vmatpush2.msra.mxu0 0.0
        %967 = vmatprep.subr.mxu0 0.0
        %968 = vmatpush2.msra.mxu0 0.0
        %969 = vmatprep.subr.mxu0 0.0
        %970 = vmatpush2.msra.mxu0 0.0
        %971 = vmatprep.subr.mxu0 0.0
        %972 = vmatpush2.msra.mxu0 0.0
        %973 = vmatprep.subr.mxu0 0.0
        %974 = vmatpush2.msra.mxu0 0.0
        %975 = vmatprep.subr.mxu0 0.0
        %976 = vmatpush2.msra.mxu0 0.0
        %977 = vmatprep.subr.mxu0 0.0
        %978 = vmatpush2.msra.mxu0 0.0
        %979 = vmatprep.mubr.f32.mxu0 0.0
        %980 = vmatmul.mubr.f32.gmra.mxu0 %v687
        %v981 = vpop.f32.mrf.mxu0
        %v982 = vadd.f32 %v907, %v981
        %v983 = vpop.f32.mrf.mxu0
        %984 = vmatprep.mubr.f32.mxu0 0.0
        %985 = vmatmul.mubr.f32.gmra.mxu0 %v690
        %v986 = vpop.f32.mrf.mxu0
        %v987 = vadd.f32 %v912, %v986
        %v988 = vpop.f32.mrf.mxu0
        %989 = vdwg.mxu0
        %v990 = vld [vmem:[%s6] sm:$0xff]
        %v991 = vld [vmem:[%s6 + $0x8] sm:$0xff]
        %993 = vset.pattern.permute.xlu0 0
        %994 = vperm.xlu0 %993, %v990
        %v995 = vpop.permute.xlu0 %994
        %998 = vset.pattern.permute.xlu0 0
        %999 = vperm.xlu0 %998, %v991
        %v1000 = vpop.permute.xlu0 %999
        %v1002 = vadd.f32 %v982, %v995
        %v1003 = vadd.f32 %v987, %v1000
        %v1004 = vmax.f32 %v1002, 0.0
        %v1005 = vmax.f32 %v1003, 0.0
        %v1006 = vld [vmem:[%s7] sm:$0xff]
        %v1007 = vld [vmem:[%s7 + $0x8] sm:$0xff]
        %v1008 = vld [vmem:[%s8] sm:$0xff]
        %v1009 = vld [vmem:[%s8 + $0x8] sm:$0xff]
        %1011 = vset.pattern.permute.xlu0 0
        %1012 = vperm.xlu0 %1011, %v1008
        %v1013 = vpop.permute.xlu0 %1012
        %1016 = vset.pattern.permute.xlu0 0
        %1017 = vperm.xlu0 %1016, %v1009
        %v1018 = vpop.permute.xlu0 %1017
        %v1021 = vsel %vm428, %v1006, 0
        %v1024 = vsel %vm428, %v1007, 0
        %1026 = vmatprep.subr.mxu0 0.0
        %1027 = vmatpush1.msra.mxu0 0.0
        %1028 = vmatprep.subr.mxu0 0.0
        %1029 = vmatpush1.msra.mxu0 0.0
        %1030 = vmatprep.subr.mxu0 0.0
        %1031 = vmatpush1.msra.mxu0 0.0
        %1032 = vmatprep.subr.mxu0 0.0
        %1033 = vmatpush1.msra.mxu0 0.0
        %1034 = vmatprep.subr.mxu0 0.0
        %1035 = vmatpush1.msra.mxu0 0.0
        %1036 = vmatprep.subr.mxu0 0.0
        %1037 = vmatpush1.msra.mxu0 0.0
        %1038 = vmatprep.subr.mxu0 0.0
        %1039 = vmatpush1.msra.mxu0 0.0
        %1040 = vmatprep.subr.mxu0 0.0
        %1041 = vmatpush1.msra.mxu0 0.0
        %1042 = vmatprep.subr.mxu0 0.0
        %1043 = vmatpush1.msra.mxu0 0.0
        %1044 = vmatprep.subr.mxu0 0.0
        %1045 = vmatpush1.msra.mxu0 0.0
        %1046 = vmatprep.subr.mxu0 0.0
        %1047 = vmatpush1.msra.mxu0 0.0
        %1048 = vmatprep.subr.mxu0 0.0
        %1049 = vmatpush1.msra.mxu0 0.0
        %1050 = vmatprep.subr.mxu0 0.0
        %1051 = vmatpush1.msra.mxu0 0.0
        %1052 = vmatprep.subr.mxu0 0.0
        %1053 = vmatpush1.msra.mxu0 0.0
        %1054 = vmatprep.subr.mxu0 0.0
        %1055 = vmatpush1.msra.mxu0 %v1005
        %1056 = vmatprep.subr.mxu0 0.0
        %1057 = vmatpush1.msra.mxu0 %v1004
        %1058 = vmatprep.subr.mxu0 0.0
        %1059 = vmatpush2.msra.mxu0 0.0
        %1060 = vmatprep.subr.mxu0 0.0
        %1061 = vmatpush2.msra.mxu0 0.0
        %1062 = vmatprep.subr.mxu0 0.0
        %1063 = vmatpush2.msra.mxu0 0.0
        %1064 = vmatprep.subr.mxu0 0.0
        %1065 = vmatpush2.msra.mxu0 0.0
        %1066 = vmatprep.subr.mxu0 0.0
        %1067 = vmatpush2.msra.mxu0 0.0
        %1068 = vmatprep.subr.mxu0 0.0
        %1069 = vmatpush2.msra.mxu0 0.0
        %1070 = vmatprep.subr.mxu0 0.0
        %1071 = vmatpush2.msra.mxu0 0.0
        %1072 = vmatprep.subr.mxu0 0.0
        %1073 = vmatpush2.msra.mxu0 0.0
        %1074 = vmatprep.subr.mxu0 0.0
        %1075 = vmatpush2.msra.mxu0 0.0
        %1076 = vmatprep.subr.mxu0 0.0
        %1077 = vmatpush2.msra.mxu0 0.0
        %1078 = vmatprep.subr.mxu0 0.0
        %1079 = vmatpush2.msra.mxu0 0.0
        %1080 = vmatprep.subr.mxu0 0.0
        %1081 = vmatpush2.msra.mxu0 0.0
        %1082 = vmatprep.subr.mxu0 0.0
        %1083 = vmatpush2.msra.mxu0 0.0
        %1084 = vmatprep.subr.mxu0 0.0
        %1085 = vmatpush2.msra.mxu0 0.0
        %1086 = vmatprep.subr.mxu0 0.0
        %1087 = vmatpush2.msra.mxu0 0.0
        %1088 = vmatprep.subr.mxu0 0.0
        %1089 = vmatpush2.msra.mxu0 0.0
        %1090 = vmatprep.mubr.f32.mxu0 0.0
        %1091 = vmatmul.mubr.f32.gmra.mxu0 %v1021
        %v1092 = vpop.f32.mrf.mxu0
        %v1093 = vadd.f32 %v1013, %v1092
        %v1094 = vpop.f32.mrf.mxu0
        %1095 = vmatprep.mubr.f32.mxu0 0.0
        %1096 = vmatmul.mubr.f32.gmra.mxu0 %v1024
        %v1097 = vpop.f32.mrf.mxu0
        %v1098 = vadd.f32 %v1018, %v1097
        %v1099 = vpop.f32.mrf.mxu0
        %1100 = vdwg.mxu0
        %1101 = vst [vmem:[%s326] sm:$0xff] %v1093
        %1102 = vst [vmem:[%s326 + $0x8] sm:$0xff] %v1098
        %s1103 = sand.u32 %s225, 1
        %s1104 = scalar_lea.sflag [#allocation3], %s1103
        %s1105 = sand.u32 %s225, 1
        %s1106 = smul.addr %s1105, 16
        %s1107 = scalar_lea.vmem [#allocation2], %s1106
        // Predicated region
        $region57: #{tpu_custom_call.1} parent=55 // pred_check
          %p1108 = pneg %p235
        $region58: #{tpu_custom_call.1} parent=55 // pred_check_branch
          %1110 = sbr.rel (%p1108) target = $region60
        $region59: #{tpu_custom_call.1} parent=55 // pred_region
          %s1111 = smul.u32 2, %s23
          %s1113 = ssub.s32 256, 256
          %1114 = vsyncadd %s1104, %s1113
          %s1115 = smul.addr %s1111, 128
          %s1116 = scalar_lea.hbm %s9, %s1115
          %s1117 = sshll.u32 %s1107, 4
          %s1118 = int_to_ptr.vmem [resolvable:$true] %s1117
          %1123 = dma.vmem_to_hbm [thread:$0]  %s1118, 256, %s1116, %s1104, 128, 128, 8
        $region60: #{tpu_custom_call.1} parent=55 // pred_fallthru
          _
      $region56: #{tpu_custom_call.1} parent=5 // pred_fallthru
        _
      %p1124 = scmp.le.s32.totalorder 2, %s18
      // Predicated region
      $region61: #{tpu_custom_call.1} parent=5 // pred_check
        %p1125 = pneg %p1124
      $region62: #{tpu_custom_call.1} parent=5 // pred_check_branch
        %1127 = sbr.rel (%p1125) target = $region64
      $region63: #{tpu_custom_call.1} parent=5 // pred_region
        %s1128 = ssub.s32 %s18, 2
        // Predicated region
        $region65: #{tpu_custom_call.1} parent=63 // pred_check
          %p1129 = pneg %p241
        $region66: #{tpu_custom_call.1} parent=63 // pred_check_branch
          %1131 = sbr.rel (%p1129) target = $region68
        $region67: #{tpu_custom_call.1} parent=63 // pred_region
          %s1132 = sand.u32 %s226, 1
          %s1133 = scalar_lea.sflag [#allocation3], %s1132
          %s1134 = sand.u32 %s226, 1
          %s1135 = smul.addr %s1134, 16
          %s1136 = scalar_lea.vmem [#allocation2], %s1135
          %1137 = dma.done %s1133, 256
        $region68: #{tpu_custom_call.1} parent=63 // pred_fallthru
          _
      $region64: #{tpu_custom_call.1} parent=5 // pred_fallthru
        _
    $region6: #{tpu_custom_call.1} parent=1 // loop_footer
      %s22 = sadd.s32 1, %s18
    $region7: #{tpu_custom_call.1} parent=1 // loop_footer_branch
      %17 = sbr.rel target = $region3
    $region8: #{tpu_custom_call.1} parent=1 // loop_exit
      _
    %1138 = vsyncpa [#allocation3], 1
    %s1139 = scalar_lea.sflag [#allocation3], 1
    %1140 = vsyncpa %s1139, 1

</llo_original>
